<compile_context>
chip_gen: v7x
topology: tpu7x:2x2x1
jax: 0.10.0
libtpu: 0.0.40
codegen_flags: <defaults>
</compile_context>

<pallas_src>
import functools

import jax
import jax.numpy as jnp
from jax.experimental import pallas as pl
from jax.experimental.pallas import tpu as pltpu

_VAR_EPS = 1e-6


def _round_up(n, m):
    return ((n + m - 1) // m) * m


def _cdiv(a, b):
    return -(-a // b)


def _gmvae2_kernel(y_ref, w_ref, b_ref, eps_ref, x_ref):
    # One fused MXU matmul for both heads (f32 operands, f32 accumulation):
    #   columns [0, X)   -> fc_mean_x
    #   columns [X, 2*X) -> fc_var_x
    fused = jnp.dot(y_ref[...], w_ref[...],
                    preferred_element_type=jnp.float32) + b_ref[...]
    x_dim = fused.shape[-1] // 2
    mean_x = fused[:, :x_dim]
    var_x = jnp.maximum(fused[:, x_dim:], 0.0) + _VAR_EPS

    # Reparameterization: x = mean + eps * sqrt(var)  (eps supplied as input).
    x_ref[...] = mean_x + eps_ref[...] * jnp.sqrt(var_x)


def fuse_head_params(w_mean, b_mean, w_var, b_var):
    """Fuse the mean/var heads into one weight/bias.

    Hoisted out of the per-call path (perf review): pay the concat/cast cost
    once, not per forward().
    """
    w_fused = jnp.concatenate([w_mean, w_var], axis=1)            # (H, 2*X)
    b_fused = jnp.concatenate([b_mean, b_var]).reshape(1, -1)     # (1, 2*X)
    return w_fused, b_fused


@functools.partial(jax.jit, static_argnames=("batch_tile",))
def gmvae2_forward(y, w_fused, b_fused, eps, *, batch_tile=1024):
    """Fused GMVAE2.forward(). Returns x_sample of shape (B, x_dim), f32."""
    B, H = y.shape
    X2 = w_fused.shape[1]
    X = X2 // 2
    assert eps.shape == (B, X)

    # Batch tile: as large as possible (per-grid-step overhead ~0.35 us, buffers
    # are tiny vs. 32 MiB scoped VMEM), but for large batches keep >= 2 grid
    # steps so the "parallel" batch axis can be sharded across both v7x
    # TensorCores (single-TC v5e/v6e unaffected).
    TB = _round_up(B, 8)
    if TB > batch_tile:
        TB = min(batch_tile, _round_up(_cdiv(_round_up(B, 8), 2), 8))
    Bp = _round_up(B, TB)

    if Bp != B:
        pad = ((0, Bp - B), (0, 0))
        y = jnp.pad(y, pad)
        eps = jnp.pad(eps, pad)

    grid = (Bp // TB,)

    x_pad = pl.pallas_call(
        _gmvae2_kernel,
        grid=grid,
        in_specs=[
            pl.BlockSpec((TB, H), lambda i: (i, 0)),    # batch tile of y
            pl.BlockSpec((H, X2), lambda i: (0, 0)),    # resident fused weight
            pl.BlockSpec((1, X2), lambda i: (0, 0)),    # resident fused bias
            pl.BlockSpec((TB, X), lambda i: (i, 0)),    # batch tile of eps
        ],
        out_specs=pl.BlockSpec((TB, X), lambda i: (i, 0)),   # x_sample (unpadded)
        out_shape=jax.ShapeDtypeStruct((Bp, X), jnp.float32),
        compiler_params=pltpu.CompilerParams(
            dimension_semantics=("parallel",),          # shard batch tiles across cores
            vmem_limit_bytes=32 * 1024 * 1024,          # valid on v5e/v6e/v7x
        ),
    )(y, w_fused, b_fused, eps)

    return x_pad[:B] if Bp != B else x_pad


def init_linear_params(key, in_dim, out_dim):
    """Deterministic init mimicking torch.nn.Linear (uniform +/- 1/sqrt(fan_in))."""
    k_w, k_b = jax.random.split(key)
    bound = 1.0 / jnp.sqrt(jnp.float32(in_dim))
    w = jax.random.uniform(k_w, (in_dim, out_dim), jnp.float32, -bound, bound)
    b = jax.random.uniform(k_b, (out_dim,), jnp.float32, -bound, bound)
    return w, b


if __name__ == "__main__":
    # GMVAE2(K=4, input_dim=32, x_dim=16, w_dim=8): forward() only uses
    # fc_mean_x / fc_var_x and the reparameterization.
    K, input_dim, x_dim, w_dim = 4, 32, 16, 8
    hidden_dim = input_dim
    B = 8

    root = jax.random.PRNGKey(0)
    k_y, k_wm, k_wv, k_eps = jax.random.split(root, 4)

    y = jax.random.normal(k_y, (B, hidden_dim), jnp.float32)
    w_mean, b_mean = init_linear_params(k_wm, hidden_dim, x_dim)
    w_var, b_var = init_linear_params(k_wv, hidden_dim, x_dim)
    # eps ~ N(0,1) drawn outside the kernel (equivalent of torch.randn).
    eps = jax.random.normal(k_eps, (B, x_dim), jnp.float32)

    # Fused head params built ONCE (hoisted out of the forward path).
    w_fused, b_fused = fuse_head_params(w_mean, b_mean, w_var, b_var)

    x_sample = gmvae2_forward(y, w_fused, b_fused, eps)
    x_sample = jax.block_until_ready(x_sample)

    assert x_sample.shape == (B, x_dim)

    # Pure-JAX f32 reference (same math as GMVAE2.forward with the same eps).
    mean_ref = jnp.dot(y, w_mean) + b_mean
    var_ref = jnp.maximum(jnp.dot(y, w_var) + b_var, 0.0) + 1e-6
    x_ref = mean_ref + eps * jnp.sqrt(var_ref)

    assert bool(jnp.all(jnp.isfinite(x_sample)))
    max_err = float(jnp.max(jnp.abs(x_sample - x_ref)))
    # Loose tolerance to allow for MXU default matmul precision on f32 operands.
    assert jnp.allclose(x_sample, x_ref, atol=1.5e-2, rtol=1e-2), max_err

    print("KERNEL_OK")
</pallas_src>

<mosaic_0001>
module attributes {stable_mosaic.version = 11 : i64} {
  func.func @_gmvae2_kernel(%arg0: i32, %arg1: memref<8x32xf32, #tpu.memory_space<vmem>>, %arg2: memref<32x32xf32, #tpu.memory_space<vmem>>, %arg3: memref<1x32xf32, #tpu.memory_space<vmem>>, %arg4: memref<8x16xf32, #tpu.memory_space<vmem>>, %arg5: memref<8x16xf32, #tpu.memory_space<vmem>>) attributes {dimension_semantics = [#tpu.dimension_semantics<parallel>], iteration_bounds = array<i64: 1>, scalar_prefetch = 0 : i64, scratch_operands = 0 : i64, tpu.core_type = #tpu.core_type<tc>, window_params = [{transform_indices = @transform_0, window_bounds = array<i64: 8, 32>}, {pipeline_mode = #tpu.pipeline_mode<synchronous>, transform_indices = @transform_1, window_bounds = array<i64: 32, 32>}, {pipeline_mode = #tpu.pipeline_mode<synchronous>, transform_indices = @transform_2, window_bounds = array<i64: 1, 32>}, {transform_indices = @transform_3, window_bounds = array<i64: 8, 16>}, {transform_indices = @transform_4, window_bounds = array<i64: 8, 16>}]} {
    %c0 = arith.constant 0 : index
    %c0_0 = arith.constant 0 : index
    %0 = vector.load %arg1[%c0, %c0_0] : memref<8x32xf32, #tpu.memory_space<vmem>>, vector<8x32xf32>
    %c0_1 = arith.constant 0 : index
    %c0_2 = arith.constant 0 : index
    %1 = vector.load %arg2[%c0_1, %c0_2] : memref<32x32xf32, #tpu.memory_space<vmem>>, vector<32x32xf32>
    %cst = arith.constant dense<0.000000e+00> : vector<8x32xf32>
    %2 = tpu.matmul %0, %1, %cst {dimension_numbers = #tpu.dot_dimension_numbers<[1], [0], [0], [1], [0, 0, 1, 1], [], []>} : vector<8x32xf32>, vector<32x32xf32>, vector<8x32xf32> -> vector<8x32xf32>
    %c0_3 = arith.constant 0 : index
    %c0_4 = arith.constant 0 : index
    %3 = vector.load %arg3[%c0_3, %c0_4] : memref<1x32xf32, #tpu.memory_space<vmem>>, vector<1x32xf32>
    %4 = vector.broadcast %3 : vector<1x32xf32> to vector<8x32xf32>
    %5 = arith.addf %2, %4 : vector<8x32xf32>
    %6 = vector.extract_strided_slice %5 {offsets = [0, 0], sizes = [8, 16], strides = [1, 1]} : vector<8x32xf32> to vector<8x16xf32>
    %7 = vector.extract_strided_slice %5 {offsets = [0, 16], sizes = [8, 16], strides = [1, 1]} : vector<8x32xf32> to vector<8x16xf32>
    %cst_5 = arith.constant 0.000000e+00 : f32
    %8 = vector.broadcast %cst_5 : f32 to vector<8x16xf32>
    %9 = arith.maximumf %7, %8 : vector<8x16xf32>
    %cst_6 = arith.constant 9.99999997E-7 : f32
    %10 = vector.broadcast %cst_6 : f32 to vector<8x16xf32>
    %11 = arith.addf %9, %10 : vector<8x16xf32>
    %c0_7 = arith.constant 0 : index
    %c0_8 = arith.constant 0 : index
    %12 = vector.load %arg4[%c0_7, %c0_8] : memref<8x16xf32, #tpu.memory_space<vmem>>, vector<8x16xf32>
    %13 = math.sqrt %11 : vector<8x16xf32>
    %14 = arith.mulf %12, %13 : vector<8x16xf32>
    %15 = arith.addf %6, %14 : vector<8x16xf32>
    %c0_9 = arith.constant 0 : index
    %c0_10 = arith.constant 0 : index
    %16 = vector.load %arg5[%c0_9, %c0_10] : memref<8x16xf32, #tpu.memory_space<vmem>>, vector<8x16xf32>
    tpu.vector_store %arg5[%c0_9, %c0_10], %15 {strides = array<i32>} : memref<8x16xf32, #tpu.memory_space<vmem>>, vector<8x16xf32>,
    return
  }
  func.func @transform_0(%arg0: i32) -> (i32, i32) {
    %c0_i32 = arith.constant 0 : i32
    %c0_i32_0 = arith.constant 0 : i32
    return %arg0, %c0_i32 : i32, i32
  }
  func.func @transform_1(%arg0: i32) -> (i32, i32) {
    %c0_i32 = arith.constant 0 : i32
    %c0_i32_0 = arith.constant 0 : i32
    %c0_i32_1 = arith.constant 0 : i32
    return %c0_i32, %c0_i32_0 : i32, i32
  }
  func.func @transform_2(%arg0: i32) -> (i32, i32) {
    %c0_i32 = arith.constant 0 : i32
    %c0_i32_0 = arith.constant 0 : i32
    %c0_i32_1 = arith.constant 0 : i32
    return %c0_i32, %c0_i32_0 : i32, i32
  }
  func.func @transform_3(%arg0: i32) -> (i32, i32) {
    %c0_i32 = arith.constant 0 : i32
    %c0_i32_0 = arith.constant 0 : i32
    return %arg0, %c0_i32 : i32, i32
  }
  func.func @transform_4(%arg0: i32) -> (i32, i32) {
    %c0_i32 = arith.constant 0 : i32
    %c0_i32_0 = arith.constant 0 : i32
    return %arg0, %c0_i32 : i32, i32
  }
}

</mosaic_0001>

<llo_original>
// kernel: gmvae2_forward.1
$region0: #{gmvae2_forward.1}
  #allocation0 [shape = 'u32[]', space=smem, size = 0x4, offset = 0x4, fixed_abs, tag = 'smem constant byte address 0x4 - core index']
  #allocation1 [shape = 'u32[144,128]{1,0:T(1,128)}', space=vmem, size = 0x12000, scoped, tag = 'internal scratch']
  %s0 = inlined_call_operand.hbm [shape: f32[8,32], index: 0, kind: input, shape index: {}]
  %s1 = inlined_call_operand.hbm [shape: f32[32,32], index: 1, kind: input, shape index: {}]
  %s2 = inlined_call_operand.vmem [shape: f32[1,32], index: 2, kind: input, shape index: {}]
  %s3 = inlined_call_operand.vmem [shape: f32[8,16], index: 3, kind: input, shape index: {}]
  %s4 = inlined_call_operand.hbm [shape: f32[8,16], index: 4, kind: output, shape index: {}]
  %s5 = sld [smem:[#allocation0]]
  $region34: #{gmvae2_forward.1} parent=0
    _
  %s7 = ssub.s32 1, %s5
  %s8 = scalar_select 0, %s7, %s5
  $region1: #{gmvae2_forward.1} parent=0
    #allocation2 [shape = 'u8[4096]{0}', space=vmem, size = 0x1000, scoped, tag = 'input window, operand 0, single buffered']
    #allocation3 [shape = 's32[1]{0}', space=sflag, size = 0x4, scoped, tag = 'scoped memory for gmvae2_forward.1']
    #allocation4 [shape = 's32[1]{0}', space=sflag, size = 0x4, scoped, tag = 'scoped memory for gmvae2_forward.1']
    #allocation5 [shape = 'u8[16384]{0}', space=vmem, size = 0x4000, scoped, tag = 'input window, operand 1, single buffered']
    #allocation6 [shape = 's32[1]{0}', space=sflag, size = 0x4, scoped, tag = 'scoped memory for gmvae2_forward.1']
    #allocation7 [shape = 'u8[4096]{0}', space=vmem, size = 0x1000, scoped, tag = 'output window, operand 0, single buffered']
    %9 = vsyncpa [#allocation3], 0
    %10 = vsyncpa [#allocation6], 0
    %11 = vsyncpa [#allocation4], 0
    // Predicated region
    $region2: #{gmvae2_forward.1} parent=1 // pred_check
      _
    $region3: #{gmvae2_forward.1} parent=1 // pred_check_branch
      %13 = sbr.rel (0) target = $region5
    $region4: #{gmvae2_forward.1} parent=1 // pred_region
      %s15 = ssub.s32 128, 128
      %16 = vsyncadd [#allocation3], %s15
      %s18 = sshll.u32 [#allocation2], 4
      %s19 = int_to_ptr.vmem [resolvable:$true] %s18
      %21 = dma.hbm_to_vmem [thread:$0]  %s0, 128, %s19, [#allocation3]
    $region5: #{gmvae2_forward.1} parent=1 // pred_fallthru
      _
    // Predicated region
    $region6: #{gmvae2_forward.1} parent=1 // pred_check
      _
    $region7: #{gmvae2_forward.1} parent=1 // pred_check_branch
      %23 = sbr.rel (0) target = $region9
    $region8: #{gmvae2_forward.1} parent=1 // pred_region
      %s25 = ssub.s32 512, 512
      %26 = vsyncadd [#allocation6], %s25
      %s27 = sshll.u32 [#allocation5], 4
      %s28 = int_to_ptr.vmem [resolvable:$true] %s27
      %33 = dma.hbm_to_vmem [thread:$0]  %s1, 512, %s28, [#allocation6], 128, 128, 8
    $region9: #{gmvae2_forward.1} parent=1 // pred_fallthru
      _
    // Predicated region
    $region10: #{gmvae2_forward.1} parent=1 // pred_check
      _
    $region11: #{gmvae2_forward.1} parent=1 // pred_check_branch
      %35 = sbr.rel (0) target = $region13
    $region12: #{gmvae2_forward.1} parent=1 // pred_region
      _
    $region13: #{gmvae2_forward.1} parent=1 // pred_fallthru
      _
    // Predicated region
    $region14: #{gmvae2_forward.1} parent=1 // pred_check
      _
    $region15: #{gmvae2_forward.1} parent=1 // pred_check_branch
      %37 = sbr.rel (0) target = $region17
    $region16: #{gmvae2_forward.1} parent=1 // pred_region
      _
    $region17: #{gmvae2_forward.1} parent=1 // pred_fallthru
      _
    // Predicated region
    $region18: #{gmvae2_forward.1} parent=1 // pred_check
      _
    $region19: #{gmvae2_forward.1} parent=1 // pred_check_branch
      %39 = sbr.rel (0) target = $region21
    $region20: #{gmvae2_forward.1} parent=1 // pred_region
      %40 = dma.done [#allocation3], 128
    $region21: #{gmvae2_forward.1} parent=1 // pred_fallthru
      _
    // Predicated region
    $region22: #{gmvae2_forward.1} parent=1 // pred_check
      _
    $region23: #{gmvae2_forward.1} parent=1 // pred_check_branch
      %42 = sbr.rel (0) target = $region25
    $region24: #{gmvae2_forward.1} parent=1 // pred_region
      %43 = dma.done [#allocation6], 512
    $region25: #{gmvae2_forward.1} parent=1 // pred_fallthru
      _
    %v44 = vld [vmem:[#allocation2] sm:$0xff]
    %v45 = vld [vmem:[#allocation5] sm:$0xff]
    %v46 = vld [vmem:[#allocation5 + $0x8] sm:$0xff]
    %v47 = vld [vmem:[#allocation5 + $0x10] sm:$0xff]
    %v48 = vld [vmem:[#allocation5 + $0x18] sm:$0xff]
    %v49 = vld [vmem:[%s2] sm:$0x1]
    %v51 = vlaneseq
    %v52 = vshrl.u32 %v51, 7
    %v53 = vsub.s32 0, %v52
    %v54 = vrot.slane %v49, %v53
    %vm56 = vcmask 261120
    %v58 = vsel %vm56, %v44, 0
    %60 = vmatprep.subr.mxu0 0.0
    %61 = vmatpush1.msra.mxu0 %v45
    %62 = vmatprep.subr.mxu0 0.0
    %63 = vmatpush1.msra.mxu0 %v46
    %64 = vmatprep.subr.mxu0 0.0
    %65 = vmatpush1.msra.mxu0 %v47
    %66 = vmatprep.subr.mxu0 0.0
    %67 = vmatpush1.msra.mxu0 %v48
    %68 = vmatprep.subr.mxu0 0.0
    %69 = vmatpush1.msra.mxu0 0.0
    %70 = vmatprep.subr.mxu0 0.0
    %71 = vmatpush1.msra.mxu0 0.0
    %72 = vmatprep.subr.mxu0 0.0
    %73 = vmatpush1.msra.mxu0 0.0
    %74 = vmatprep.subr.mxu0 0.0
    %75 = vmatpush1.msra.mxu0 0.0
    %76 = vmatprep.subr.mxu0 0.0
    %77 = vmatpush1.msra.mxu0 0.0
    %78 = vmatprep.subr.mxu0 0.0
    %79 = vmatpush1.msra.mxu0 0.0
    %80 = vmatprep.subr.mxu0 0.0
    %81 = vmatpush1.msra.mxu0 0.0
    %82 = vmatprep.subr.mxu0 0.0
    %83 = vmatpush1.msra.mxu0 0.0
    %84 = vmatprep.subr.mxu0 0.0
    %85 = vmatpush1.msra.mxu0 0.0
    %86 = vmatprep.subr.mxu0 0.0
    %87 = vmatpush1.msra.mxu0 0.0
    %88 = vmatprep.subr.mxu0 0.0
    %89 = vmatpush1.msra.mxu0 0.0
    %90 = vmatprep.subr.mxu0 0.0
    %91 = vmatpush1.msra.mxu0 0.0
    %92 = vmatprep.subr.mxu0 0.0
    %93 = vmatpush1.msra.mxu0 0.0
    %94 = vmatprep.subr.mxu0 0.0
    %95 = vmatpush1.msra.mxu0 0.0
    %96 = vmatprep.subr.mxu0 0.0
    %97 = vmatpush1.msra.mxu0 0.0
    %98 = vmatprep.subr.mxu0 0.0
    %99 = vmatpush1.msra.mxu0 0.0
    %100 = vmatprep.subr.mxu0 0.0
    %101 = vmatpush1.msra.mxu0 0.0
    %102 = vmatprep.subr.mxu0 0.0
    %103 = vmatpush1.msra.mxu0 0.0
    %104 = vmatprep.subr.mxu0 0.0
    %105 = vmatpush1.msra.mxu0 0.0
    %106 = vmatprep.subr.mxu0 0.0
    %107 = vmatpush1.msra.mxu0 0.0
    %108 = vmatprep.subr.mxu0 0.0
    %109 = vmatpush1.msra.mxu0 0.0
    %110 = vmatprep.subr.mxu0 0.0
    %111 = vmatpush1.msra.mxu0 0.0
    %112 = vmatprep.subr.mxu0 0.0
    %113 = vmatpush1.msra.mxu0 0.0
    %114 = vmatprep.subr.mxu0 0.0
    %115 = vmatpush1.msra.mxu0 0.0
    %116 = vmatprep.subr.mxu0 0.0
    %117 = vmatpush1.msra.mxu0 0.0
    %118 = vmatprep.subr.mxu0 0.0
    %119 = vmatpush1.msra.mxu0 0.0
    %120 = vmatprep.subr.mxu0 0.0
    %121 = vmatpush1.msra.mxu0 0.0
    %122 = vmatprep.subr.mxu0 0.0
    %123 = vmatpush1.msra.mxu0 0.0
    %124 = vmatprep.mubr.f32.mxu0 0.0
    %125 = vmatmul.mubr.f32.gmra.mrb[0].mxu0 %v58
    %v126 = vpop.f32.mrb[0].mxu0
    %v127 = vadd.f32 %v54, %v126
    %v128 = vpop.f32.mrb[0].mxu0
    %129 = vdwg.mxu0
    %v130 = vmax.f32 %v127, 0.0
    %v131 = vadd.f32 %v130, 1e-06
    %v132 = vld [vmem:[%s3] sm:$0xff]
    %v133 = vrsqrt.pop %v131
    %v134 = vmul.f32 %v131, %v133
    %vm135 = vcmp.eq.f32.partialorder %v131, inf
    %v136 = vsel %vm135, %v131, %v134
    %vm137 = vcmp.eq.f32.partialorder %v131, 0.0
    %v138 = vand.u32 %v131, 2147483648
    %v139 = vsel %vm137, %v138, %v136
    %141 = vrot.lane.b32.xlu0 %v139, 112
    %v142 = vpop.permute.xlu0 %141
    %v144 = vmul.f32 %v132, %v142
    %v145 = vadd.f32 %v127, %v144
    %vm146 = vcmask 130048
    %147 = vst.msk [vmem:[#allocation7] sm:$0xff] %vm146, %v145
    // Predicated region
    $region26: #{gmvae2_forward.1} parent=1 // pred_check
      _
    $region27: #{gmvae2_forward.1} parent=1 // pred_check_branch
      %149 = sbr.rel (0) target = $region29
    $region28: #{gmvae2_forward.1} parent=1 // pred_region
      %s151 = ssub.s32 128, 128
      %152 = vsyncadd [#allocation4], %s151
      %s154 = sshll.u32 [#allocation7], 4
      %s155 = int_to_ptr.vmem [resolvable:$true] %s154
      %157 = dma.vmem_to_hbm [thread:$0]  %s155, 128, %s4, [#allocation4]
    $region29: #{gmvae2_forward.1} parent=1 // pred_fallthru
      _
    // Predicated region
    $region30: #{gmvae2_forward.1} parent=1 // pred_check
      _
    $region31: #{gmvae2_forward.1} parent=1 // pred_check_branch
      %159 = sbr.rel (0) target = $region33
    $region32: #{gmvae2_forward.1} parent=1 // pred_region
      %160 = dma.done [#allocation4], 128
    $region33: #{gmvae2_forward.1} parent=1 // pred_fallthru
      _
    %161 = vsyncpa [#allocation3], 1
    %162 = vsyncpa [#allocation6], 1
    %163 = vsyncpa [#allocation4], 1

</llo_original>
